<compile_context>
chip_gen: v7x
topology: tpu7x:2x2x1
jax: 0.10.0
libtpu: 0.0.40
codegen_flags: <defaults>
</compile_context>

<pallas_src>
import functools

import jax
import jax.numpy as jnp
from jax.experimental import pallas as pl
from jax.experimental.pallas import tpu as pltpu


def _round_up(x, m):
    return (x + m - 1) // m * m


def _leaky_relu(x, slope=0.2):
    return jnp.where(x > 0, x, slope * x)


# ----------------------------------------------------------------------------
# Phase 1: input Linear + hidden blocks (full batch, grid-less, VMEM resident)
# ----------------------------------------------------------------------------
def _hidden_stack_kernel(*refs, num_hidden, normalize, bn_eps, n_real):
    """refs = [x, w0, b0, (w, b, gamma, beta) * num_hidden, h_out]."""
    x_ref = refs[0]
    h_out_ref = refs[-1]
    params = refs[1:-1]

    # input Linear + LeakyReLU (bf16 matmul, f32 accumulate)
    w0, b0 = params[0], params[1]
    h = jnp.dot(x_ref[...], w0[...], preferred_element_type=jnp.float32)
    h = _leaky_relu(h + b0[...])

    n_pad = h.shape[0]
    if normalize and n_pad != n_real:
        row_ids = jax.lax.broadcasted_iota(jnp.int32, (n_pad, 1), 0)
        row_mask = (row_ids < n_real).astype(jnp.float32)
    else:
        row_mask = None
    inv_n = 1.0 / float(n_real)

    idx = 2
    for _ in range(num_hidden):
        w, b, gamma, beta = params[idx], params[idx + 1], params[idx + 2], params[idx + 3]
        idx += 4

        h = jnp.dot(h.astype(w.dtype), w[...], preferred_element_type=jnp.float32)
        h = h + b[...]

        if normalize:
            # Fused single-pass batch statistics over REAL rows only.
            hm = h if row_mask is None else h * row_mask
            mean = jnp.sum(hm, axis=0, keepdims=True) * inv_n
            ex2 = jnp.sum(hm * h, axis=0, keepdims=True) * inv_n
            var = ex2 - mean * mean                       # biased batch variance
            inv_std = jax.lax.rsqrt(var + bn_eps)         # eps = 0.8 (BatchNorm1d(H, 0.8))
            scale = gamma[...] * inv_std
            shift = beta[...] - mean * scale
            h = h * scale + shift

        h = _leaky_relu(h)

    h_out_ref[...] = h.astype(h_out_ref.dtype)


# ----------------------------------------------------------------------------
# Phase 2: final Linear + Tanh, tiled over output features
# ----------------------------------------------------------------------------
def _final_layer_kernel(h_ref, wf_ref, bf_ref, out_ref):
    y = jnp.dot(h_ref[...], wf_ref[...], preferred_element_type=jnp.float32)
    out_ref[...] = jnp.tanh(y + bf_ref[...])


def _choose_tile_n(out_dim_128, n_pad, h_pad, budget_bytes=12 * 1024 * 1024):
    """Largest lane-dense tile whose per-step VMEM footprint fits the budget."""
    h_bytes = 2 * n_pad * h_pad * 2  # resident hidden activations (bf16, 2 bufs)
    for cand in (2048, 1024, 512, 256, 128):
        if out_dim_128 % cand != 0:
            continue
        need = (2 * h_pad * cand * 2      # wf tile, bf16, double-buffered
                + 2 * cand * 4            # bias tile
                + 2 * n_pad * cand * 4    # output tile, f32, double-buffered
                + h_bytes)
        if need <= budget_bytes:
            return cand
    return 128


# ----------------------------------------------------------------------------
# Wrapper
# ----------------------------------------------------------------------------
def generator_fc_forward(x, params, *, num_hidden=3, normalize=True, bn_eps=0.8):
    """params: [w0, b0, (w, b, gamma, beta) * num_hidden, wf, bf];
    every weight is stored as (in_features, out_features) == PyTorch weight.T."""
    n = x.shape[0]
    x2 = x.reshape(n, -1)
    in_dim = x2.shape[1]
    h_dim = params[0].shape[1]
    out_dim = params[-1].shape[-1]

    # Alignment padding: lanes to 128, batch (sublanes) to 8.
    n_pad = _round_up(max(n, 8), 8)
    in_pad = _round_up(in_dim, 128)
    h_pad = _round_up(h_dim, 128)
    out_pad = _round_up(out_dim, 128)
    tile_n = _choose_tile_n(out_pad, n_pad, h_pad)

    f32 = jnp.float32
    bf16 = jnp.bfloat16

    xp = jnp.pad(x2.astype(f32), ((0, n_pad - n), (0, in_pad - in_dim))).astype(bf16)

    # --- pad / cast parameters -------------------------------------------
    w0, b0 = params[0], params[1]
    args1 = [
        xp,
        jnp.pad(w0.astype(f32), ((0, in_pad - in_dim), (0, h_pad - h_dim))).astype(bf16),
        jnp.pad(b0.reshape(1, -1).astype(f32), ((0, 0), (0, h_pad - h_dim))),
    ]
    idx = 2
    for _ in range(num_hidden):
        w, b, gamma, beta = params[idx], params[idx + 1], params[idx + 2], params[idx + 3]
        idx += 4
        args1 += [
            jnp.pad(w.astype(f32), ((0, h_pad - h_dim), (0, h_pad - h_dim))).astype(bf16),
            jnp.pad(b.reshape(1, -1).astype(f32), ((0, 0), (0, h_pad - h_dim))),
            jnp.pad(gamma.reshape(1, -1).astype(f32), ((0, 0), (0, h_pad - h_dim))),
            jnp.pad(beta.reshape(1, -1).astype(f32), ((0, 0), (0, h_pad - h_dim))),
        ]
    wf, bf = params[idx], params[idx + 1]
    wfp = jnp.pad(wf.astype(f32), ((0, h_pad - h_dim), (0, out_pad - out_dim))).astype(bf16)
    bfp = jnp.pad(bf.reshape(1, -1).astype(f32), ((0, 0), (0, out_pad - out_dim)))

    # --- phase 1: hidden stack (full batch for BatchNorm) ------------------
    hidden_kernel = functools.partial(
        _hidden_stack_kernel,
        num_hidden=num_hidden,
        normalize=normalize,
        bn_eps=float(bn_eps),
        n_real=n,
    )
    h_act = pl.pallas_call(
        hidden_kernel,
        out_shape=jax.ShapeDtypeStruct((n_pad, h_pad), bf16),
        in_specs=[pl.BlockSpec(memory_space=pltpu.MemorySpace.VMEM)] * len(args1),
        out_specs=pl.BlockSpec(memory_space=pltpu.MemorySpace.VMEM),
        compiler_params=pltpu.CompilerParams(vmem_limit_bytes=32 * 1024 * 1024),
    )(*args1)

    # --- phase 2: final Linear + Tanh, streamed over output columns --------
    grid = (out_pad // tile_n,)
    y = pl.pallas_call(
        _final_layer_kernel,
        out_shape=jax.ShapeDtypeStruct((n_pad, out_pad), f32),
        grid_spec=pltpu.PrefetchScalarGridSpec(
            num_scalar_prefetch=0,
            grid=grid,
            in_specs=[
                pl.BlockSpec((n_pad, h_pad), lambda j: (0, 0)),   # hidden acts (resident)
                pl.BlockSpec((h_pad, tile_n), lambda j: (0, j)),  # streamed weight tile
                pl.BlockSpec((1, tile_n), lambda j: (0, j)),      # bias tile
            ],
            out_specs=pl.BlockSpec((n_pad, tile_n), lambda j: (0, j)),
        ),
        compiler_params=pltpu.CompilerParams(
            dimension_semantics=("parallel",),
            vmem_limit_bytes=32 * 1024 * 1024,
        ),
    )(h_act, wfp, bfp)

    return y[:n, :out_dim]


# ----------------------------------------------------------------------------
# Parameter init (PyTorch-style U(-1/sqrt(fan_in), 1/sqrt(fan_in)))
# ----------------------------------------------------------------------------
def init_generator_fc_params(
    key, input_node_size, output_shape, hidden_node_size=256, hidden_node_num=3
):
    output_node_size = output_shape[0] * output_shape[1] * output_shape[2]

    def linear(key, fan_in, fan_out):
        kw, kb = jax.random.split(key)
        bound = 1.0 / jnp.sqrt(fan_in)
        w = jax.random.uniform(kw, (fan_in, fan_out), jnp.float32, -bound, bound)
        b = jax.random.uniform(kb, (1, fan_out), jnp.float32, -bound, bound)
        return w, b

    params = []
    keys = jax.random.split(key, hidden_node_num + 2)

    w, b = linear(keys[0], input_node_size, hidden_node_size)
    params += [w, b]
    for i in range(hidden_node_num):
        w, b = linear(keys[1 + i], hidden_node_size, hidden_node_size)
        gamma = jnp.ones((1, hidden_node_size), jnp.float32)
        beta = jnp.zeros((1, hidden_node_size), jnp.float32)
        params += [w, b, gamma, beta]
    w, b = linear(keys[-1], hidden_node_size, output_node_size)
    params += [w, b]
    return params


# ----------------------------------------------------------------------------
# Pure-JAX reference (f32) for correctness checking
# ----------------------------------------------------------------------------
def _reference_forward(x, params, *, num_hidden, normalize, bn_eps):
    h = x.reshape(x.shape[0], -1).astype(jnp.float32)
    h = _leaky_relu(h @ params[0] + params[1])
    idx = 2
    for _ in range(num_hidden):
        w, b, gamma, beta = params[idx], params[idx + 1], params[idx + 2], params[idx + 3]
        idx += 4
        h = h @ w + b
        if normalize:
            mean = jnp.mean(h, axis=0, keepdims=True)
            var = jnp.mean((h - mean) ** 2, axis=0, keepdims=True)
            h = (h - mean) / jnp.sqrt(var + bn_eps) * gamma + beta
        h = _leaky_relu(h)
    return jnp.tanh(h @ params[idx] + params[idx + 1])


if __name__ == "__main__":
    # Small, module-consistent shapes.
    batch = 2
    input_node_size = 16
    hidden_node_size = 32
    hidden_node_num = 3
    output_shape = (1, 8, 8)  # -> flat output of 64

    key = jax.random.PRNGKey(0)
    k_params, k_x = jax.random.split(key)

    params = init_generator_fc_params(
        k_params,
        input_node_size,
        output_shape,
        hidden_node_size=hidden_node_size,
        hidden_node_num=hidden_node_num,
    )
    x = jax.random.normal(k_x, (batch, input_node_size), jnp.float32)

    out = generator_fc_forward(
        x, params, num_hidden=hidden_node_num, normalize=True, bn_eps=0.8
    )
    out = jax.block_until_ready(out)

    out_dim = output_shape[0] * output_shape[1] * output_shape[2]
    assert out.shape == (batch, out_dim)
    assert bool(jnp.all(jnp.isfinite(out)))
    assert bool(jnp.all(jnp.abs(out) <= 1.0))  # tanh range

    ref = _reference_forward(
        x, params, num_hidden=hidden_node_num, normalize=True, bn_eps=0.8
    )
    max_err = float(jnp.max(jnp.abs(out - ref)))
    assert max_err < 5e-2, f"mismatch vs reference: {max_err}"

    print("KERNEL_OK")
</pallas_src>

<mosaic_0001>
module attributes {stable_mosaic.version = 11 : i64} {
  func.func @_hidden_stack_kernel(%arg0: memref<8x128xbf16, #tpu.memory_space<vmem>>, %arg1: memref<128x128xbf16, #tpu.memory_space<vmem>>, %arg2: memref<1x128xf32, #tpu.memory_space<vmem>>, %arg3: memref<128x128xbf16, #tpu.memory_space<vmem>>, %arg4: memref<1x128xf32, #tpu.memory_space<vmem>>, %arg5: memref<1x128xf32, #tpu.memory_space<vmem>>, %arg6: memref<1x128xf32, #tpu.memory_space<vmem>>, %arg7: memref<128x128xbf16, #tpu.memory_space<vmem>>, %arg8: memref<1x128xf32, #tpu.memory_space<vmem>>, %arg9: memref<1x128xf32, #tpu.memory_space<vmem>>, %arg10: memref<1x128xf32, #tpu.memory_space<vmem>>, %arg11: memref<128x128xbf16, #tpu.memory_space<vmem>>, %arg12: memref<1x128xf32, #tpu.memory_space<vmem>>, %arg13: memref<1x128xf32, #tpu.memory_space<vmem>>, %arg14: memref<1x128xf32, #tpu.memory_space<vmem>>, %arg15: memref<8x128xbf16, #tpu.memory_space<vmem>>) attributes {dimension_semantics = [], scalar_prefetch = 0 : i64, scratch_operands = 0 : i64, tpu.core_type = #tpu.core_type<tc>} {
    %c0 = arith.constant 0 : index
    %c0_0 = arith.constant 0 : index
    %0 = vector.load %arg0[%c0, %c0_0] : memref<8x128xbf16, #tpu.memory_space<vmem>>, vector<8x128xbf16>
    %c0_1 = arith.constant 0 : index
    %c0_2 = arith.constant 0 : index
    %1 = vector.load %arg1[%c0_1, %c0_2] : memref<128x128xbf16, #tpu.memory_space<vmem>>, vector<128x128xbf16>
    %cst = arith.constant dense<0.000000e+00> : vector<8x128xf32>
    %2 = tpu.matmul %0, %1, %cst {dimension_numbers = #tpu.dot_dimension_numbers<[1], [0], [0], [1], [0, 0, 1, 1], [], []>} : vector<8x128xbf16>, vector<128x128xbf16>, vector<8x128xf32> -> vector<8x128xf32>
    %c0_3 = arith.constant 0 : index
    %c0_4 = arith.constant 0 : index
    %3 = vector.load %arg2[%c0_3, %c0_4] : memref<1x128xf32, #tpu.memory_space<vmem>>, vector<1x128xf32>
    %4 = vector.broadcast %3 : vector<1x128xf32> to vector<8x128xf32>
    %5 = arith.addf %2, %4 : vector<8x128xf32>
    %cst_5 = arith.constant 0.000000e+00 : f32
    %6 = vector.broadcast %cst_5 : f32 to vector<8x128xf32>
    %7 = arith.cmpf ogt, %5, %6 : vector<8x128xf32>
    %cst_6 = arith.constant 2.000000e-01 : f32
    %8 = vector.broadcast %cst_6 : f32 to vector<8x128xf32>
    %9 = arith.mulf %8, %5 : vector<8x128xf32>
    %10 = arith.select %7, %5, %9 : vector<8x128xi1>, vector<8x128xf32>
    %11 = tpu.iota {dimensions = array<i32: 0>} : vector<8x1xi32>
    %c2_i32 = arith.constant 2 : i32
    %12 = vector.broadcast %c2_i32 : i32 to vector<8x1xi32>
    %13 = arith.cmpi slt, %11, %12 : vector<8x1xi32>
    %14 = arith.extui %13 : vector<8x1xi1> to vector<8x1xi32>
    %15 = arith.sitofp %14 : vector<8x1xi32> to vector<8x1xf32>
    %16 = arith.truncf %10 : vector<8x128xf32> to vector<8x128xbf16>
    %c0_7 = arith.constant 0 : index
    %c0_8 = arith.constant 0 : index
    %17 = vector.load %arg3[%c0_7, %c0_8] : memref<128x128xbf16, #tpu.memory_space<vmem>>, vector<128x128xbf16>
    %cst_9 = arith.constant dense<0.000000e+00> : vector<8x128xf32>
    %18 = tpu.matmul %16, %17, %cst_9 {dimension_numbers = #tpu.dot_dimension_numbers<[1], [0], [0], [1], [0, 0, 1, 1], [], []>} : vector<8x128xbf16>, vector<128x128xbf16>, vector<8x128xf32> -> vector<8x128xf32>
    %c0_10 = arith.constant 0 : index
    %c0_11 = arith.constant 0 : index
    %19 = vector.load %arg4[%c0_10, %c0_11] : memref<1x128xf32, #tpu.memory_space<vmem>>, vector<1x128xf32>
    %20 = vector.broadcast %19 : vector<1x128xf32> to vector<8x128xf32>
    %21 = arith.addf %18, %20 : vector<8x128xf32>
    %22 = vector.broadcast %15 : vector<8x1xf32> to vector<8x128xf32>
    %23 = arith.mulf %21, %22 : vector<8x128xf32>
    %cst_12 = arith.constant dense<0.000000e+00> : vector<128xf32>
    %24 = vector.multi_reduction <add>, %23, %cst_12 [0] : vector<8x128xf32> to vector<128xf32>
    %25 = vector.shape_cast %24 : vector<128xf32> to vector<1x128xf32>
    %cst_13 = arith.constant 5.000000e-01 : f32
    %26 = vector.broadcast %cst_13 : f32 to vector<1x128xf32>
    %27 = arith.mulf %25, %26 : vector<1x128xf32>
    %28 = arith.mulf %23, %21 : vector<8x128xf32>
    %cst_14 = arith.constant dense<0.000000e+00> : vector<128xf32>
    %29 = vector.multi_reduction <add>, %28, %cst_14 [0] : vector<8x128xf32> to vector<128xf32>
    %30 = vector.shape_cast %29 : vector<128xf32> to vector<1x128xf32>
    %cst_15 = arith.constant 5.000000e-01 : f32
    %31 = vector.broadcast %cst_15 : f32 to vector<1x128xf32>
    %32 = arith.mulf %30, %31 : vector<1x128xf32>
    %33 = arith.mulf %27, %27 : vector<1x128xf32>
    %34 = arith.subf %32, %33 : vector<1x128xf32>
    %cst_16 = arith.constant 8.000000e-01 : f32
    %35 = vector.broadcast %cst_16 : f32 to vector<1x128xf32>
    %36 = arith.addf %34, %35 : vector<1x128xf32>
    %37 = math.rsqrt %36 : vector<1x128xf32>
    %c0_17 = arith.constant 0 : index
    %c0_18 = arith.constant 0 : index
    %38 = vector.load %arg5[%c0_17, %c0_18] : memref<1x128xf32, #tpu.memory_space<vmem>>, vector<1x128xf32>
    %39 = arith.mulf %38, %37 : vector<1x128xf32>
    %c0_19 = arith.constant 0 : index
    %c0_20 = arith.constant 0 : index
    %40 = vector.load %arg6[%c0_19, %c0_20] : memref<1x128xf32, #tpu.memory_space<vmem>>, vector<1x128xf32>
    %41 = arith.mulf %27, %39 : vector<1x128xf32>
    %42 = arith.subf %40, %41 : vector<1x128xf32>
    %43 = vector.broadcast %39 : vector<1x128xf32> to vector<8x128xf32>
    %44 = arith.mulf %21, %43 : vector<8x128xf32>
    %45 = vector.broadcast %42 : vector<1x128xf32> to vector<8x128xf32>
    %46 = arith.addf %44, %45 : vector<8x128xf32>
    %cst_21 = arith.constant 0.000000e+00 : f32
    %47 = vector.broadcast %cst_21 : f32 to vector<8x128xf32>
    %48 = arith.cmpf ogt, %46, %47 : vector<8x128xf32>
    %cst_22 = arith.constant 2.000000e-01 : f32
    %49 = vector.broadcast %cst_22 : f32 to vector<8x128xf32>
    %50 = arith.mulf %49, %46 : vector<8x128xf32>
    %51 = arith.select %48, %46, %50 : vector<8x128xi1>, vector<8x128xf32>
    %52 = arith.truncf %51 : vector<8x128xf32> to vector<8x128xbf16>
    %c0_23 = arith.constant 0 : index
    %c0_24 = arith.constant 0 : index
    %53 = vector.load %arg7[%c0_23, %c0_24] : memref<128x128xbf16, #tpu.memory_space<vmem>>, vector<128x128xbf16>
    %cst_25 = arith.constant dense<0.000000e+00> : vector<8x128xf32>
    %54 = tpu.matmul %52, %53, %cst_25 {dimension_numbers = #tpu.dot_dimension_numbers<[1], [0], [0], [1], [0, 0, 1, 1], [], []>} : vector<8x128xbf16>, vector<128x128xbf16>, vector<8x128xf32> -> vector<8x128xf32>
    %c0_26 = arith.constant 0 : index
    %c0_27 = arith.constant 0 : index
    %55 = vector.load %arg8[%c0_26, %c0_27] : memref<1x128xf32, #tpu.memory_space<vmem>>, vector<1x128xf32>
    %56 = vector.broadcast %55 : vector<1x128xf32> to vector<8x128xf32>
    %57 = arith.addf %54, %56 : vector<8x128xf32>
    %58 = vector.broadcast %15 : vector<8x1xf32> to vector<8x128xf32>
    %59 = arith.mulf %57, %58 : vector<8x128xf32>
    %cst_28 = arith.constant dense<0.000000e+00> : vector<128xf32>
    %60 = vector.multi_reduction <add>, %59, %cst_28 [0] : vector<8x128xf32> to vector<128xf32>
    %61 = vector.shape_cast %60 : vector<128xf32> to vector<1x128xf32>
    %cst_29 = arith.constant 5.000000e-01 : f32
    %62 = vector.broadcast %cst_29 : f32 to vector<1x128xf32>
    %63 = arith.mulf %61, %62 : vector<1x128xf32>
    %64 = arith.mulf %59, %57 : vector<8x128xf32>
    %cst_30 = arith.constant dense<0.000000e+00> : vector<128xf32>
    %65 = vector.multi_reduction <add>, %64, %cst_30 [0] : vector<8x128xf32> to vector<128xf32>
    %66 = vector.shape_cast %65 : vector<128xf32> to vector<1x128xf32>
    %cst_31 = arith.constant 5.000000e-01 : f32
    %67 = vector.broadcast %cst_31 : f32 to vector<1x128xf32>
    %68 = arith.mulf %66, %67 : vector<1x128xf32>
    %69 = arith.mulf %63, %63 : vector<1x128xf32>
    %70 = arith.subf %68, %69 : vector<1x128xf32>
    %cst_32 = arith.constant 8.000000e-01 : f32
    %71 = vector.broadcast %cst_32 : f32 to vector<1x128xf32>
    %72 = arith.addf %70, %71 : vector<1x128xf32>
    %73 = math.rsqrt %72 : vector<1x128xf32>
    %c0_33 = arith.constant 0 : index
    %c0_34 = arith.constant 0 : index
    %74 = vector.load %arg9[%c0_33, %c0_34] : memref<1x128xf32, #tpu.memory_space<vmem>>, vector<1x128xf32>
    %75 = arith.mulf %74, %73 : vector<1x128xf32>
    %c0_35 = arith.constant 0 : index
    %c0_36 = arith.constant 0 : index
    %76 = vector.load %arg10[%c0_35, %c0_36] : memref<1x128xf32, #tpu.memory_space<vmem>>, vector<1x128xf32>
    %77 = arith.mulf %63, %75 : vector<1x128xf32>
    %78 = arith.subf %76, %77 : vector<1x128xf32>
    %79 = vector.broadcast %75 : vector<1x128xf32> to vector<8x128xf32>
    %80 = arith.mulf %57, %79 : vector<8x128xf32>
    %81 = vector.broadcast %78 : vector<1x128xf32> to vector<8x128xf32>
    %82 = arith.addf %80, %81 : vector<8x128xf32>
    %cst_37 = arith.constant 0.000000e+00 : f32
    %83 = vector.broadcast %cst_37 : f32 to vector<8x128xf32>
    %84 = arith.cmpf ogt, %82, %83 : vector<8x128xf32>
    %cst_38 = arith.constant 2.000000e-01 : f32
    %85 = vector.broadcast %cst_38 : f32 to vector<8x128xf32>
    %86 = arith.mulf %85, %82 : vector<8x128xf32>
    %87 = arith.select %84, %82, %86 : vector<8x128xi1>, vector<8x128xf32>
    %88 = arith.truncf %87 : vector<8x128xf32> to vector<8x128xbf16>
    %c0_39 = arith.constant 0 : index
    %c0_40 = arith.constant 0 : index
    %89 = vector.load %arg11[%c0_39, %c0_40] : memref<128x128xbf16, #tpu.memory_space<vmem>>, vector<128x128xbf16>
    %cst_41 = arith.constant dense<0.000000e+00> : vector<8x128xf32>
    %90 = tpu.matmul %88, %89, %cst_41 {dimension_numbers = #tpu.dot_dimension_numbers<[1], [0], [0], [1], [0, 0, 1, 1], [], []>} : vector<8x128xbf16>, vector<128x128xbf16>, vector<8x128xf32> -> vector<8x128xf32>
    %c0_42 = arith.constant 0 : index
    %c0_43 = arith.constant 0 : index
    %91 = vector.load %arg12[%c0_42, %c0_43] : memref<1x128xf32, #tpu.memory_space<vmem>>, vector<1x128xf32>
    %92 = vector.broadcast %91 : vector<1x128xf32> to vector<8x128xf32>
    %93 = arith.addf %90, %92 : vector<8x128xf32>
    %94 = vector.broadcast %15 : vector<8x1xf32> to vector<8x128xf32>
    %95 = arith.mulf %93, %94 : vector<8x128xf32>
    %cst_44 = arith.constant dense<0.000000e+00> : vector<128xf32>
    %96 = vector.multi_reduction <add>, %95, %cst_44 [0] : vector<8x128xf32> to vector<128xf32>
    %97 = vector.shape_cast %96 : vector<128xf32> to vector<1x128xf32>
    %cst_45 = arith.constant 5.000000e-01 : f32
    %98 = vector.broadcast %cst_45 : f32 to vector<1x128xf32>
    %99 = arith.mulf %97, %98 : vector<1x128xf32>
    %100 = arith.mulf %95, %93 : vector<8x128xf32>
    %cst_46 = arith.constant dense<0.000000e+00> : vector<128xf32>
    %101 = vector.multi_reduction <add>, %100, %cst_46 [0] : vector<8x128xf32> to vector<128xf32>
    %102 = vector.shape_cast %101 : vector<128xf32> to vector<1x128xf32>
    %cst_47 = arith.constant 5.000000e-01 : f32
    %103 = vector.broadcast %cst_47 : f32 to vector<1x128xf32>
    %104 = arith.mulf %102, %103 : vector<1x128xf32>
    %105 = arith.mulf %99, %99 : vector<1x128xf32>
    %106 = arith.subf %104, %105 : vector<1x128xf32>
    %cst_48 = arith.constant 8.000000e-01 : f32
    %107 = vector.broadcast %cst_48 : f32 to vector<1x128xf32>
    %108 = arith.addf %106, %107 : vector<1x128xf32>
    %109 = math.rsqrt %108 : vector<1x128xf32>
    %c0_49 = arith.constant 0 : index
    %c0_50 = arith.constant 0 : index
    %110 = vector.load %arg13[%c0_49, %c0_50] : memref<1x128xf32, #tpu.memory_space<vmem>>, vector<1x128xf32>
    %111 = arith.mulf %110, %109 : vector<1x128xf32>
    %c0_51 = arith.constant 0 : index
    %c0_52 = arith.constant 0 : index
    %112 = vector.load %arg14[%c0_51, %c0_52] : memref<1x128xf32, #tpu.memory_space<vmem>>, vector<1x128xf32>
    %113 = arith.mulf %99, %111 : vector<1x128xf32>
    %114 = arith.subf %112, %113 : vector<1x128xf32>
    %115 = vector.broadcast %111 : vector<1x128xf32> to vector<8x128xf32>
    %116 = arith.mulf %93, %115 : vector<8x128xf32>
    %117 = vector.broadcast %114 : vector<1x128xf32> to vector<8x128xf32>
    %118 = arith.addf %116, %117 : vector<8x128xf32>
    %cst_53 = arith.constant 0.000000e+00 : f32
    %119 = vector.broadcast %cst_53 : f32 to vector<8x128xf32>
    %120 = arith.cmpf ogt, %118, %119 : vector<8x128xf32>
    %cst_54 = arith.constant 2.000000e-01 : f32
    %121 = vector.broadcast %cst_54 : f32 to vector<8x128xf32>
    %122 = arith.mulf %121, %118 : vector<8x128xf32>
    %123 = arith.select %120, %118, %122 : vector<8x128xi1>, vector<8x128xf32>
    %124 = arith.truncf %123 : vector<8x128xf32> to vector<8x128xbf16>
    %c0_55 = arith.constant 0 : index
    %c0_56 = arith.constant 0 : index
    %125 = vector.load %arg15[%c0_55, %c0_56] : memref<8x128xbf16, #tpu.memory_space<vmem>>, vector<8x128xbf16>
    tpu.vector_store %arg15[%c0_55, %c0_56], %124 {strides = array<i32>} : memref<8x128xbf16, #tpu.memory_space<vmem>>, vector<8x128xbf16>,
    return
  }
}

</mosaic_0001>

<llo_original>
// kernel: tpu_custom_call.1
$region0: #{tpu_custom_call.1}
  #allocation0 [shape = 'u32[]', space=smem, size = 0x4, offset = 0x4, fixed_abs, tag = 'smem constant byte address 0x4 - core index']
  #allocation1 [shape = 'u32[144,128]{1,0:T(1,128)}', space=vmem, size = 0x12000, scoped, tag = 'internal scratch']
  %s0 = inlined_call_operand.hbm [shape: bf16[8,128], index: 0, kind: input, shape index: {}]
  %s1 = inlined_call_operand.hbm [shape: bf16[128,128], index: 1, kind: input, shape index: {}]
  %s2 = inlined_call_operand.vmem [shape: f32[1,128], index: 2, kind: input, shape index: {}]
  %s3 = inlined_call_operand.hbm [shape: bf16[128,128], index: 3, kind: input, shape index: {}]
  %s4 = inlined_call_operand.vmem [shape: f32[1,128], index: 4, kind: input, shape index: {}]
  %s5 = inlined_call_operand.vmem [shape: f32[1,128], index: 5, kind: input, shape index: {}]
  %s6 = inlined_call_operand.vmem [shape: f32[1,128], index: 6, kind: input, shape index: {}]
  %s7 = inlined_call_operand.hbm [shape: bf16[128,128], index: 7, kind: input, shape index: {}]
  %s8 = inlined_call_operand.vmem [shape: f32[1,128], index: 8, kind: input, shape index: {}]
  %s9 = inlined_call_operand.vmem [shape: f32[1,128], index: 9, kind: input, shape index: {}]
  %s10 = inlined_call_operand.vmem [shape: f32[1,128], index: 10, kind: input, shape index: {}]
  %s11 = inlined_call_operand.hbm [shape: bf16[128,128], index: 11, kind: input, shape index: {}]
  %s12 = inlined_call_operand.vmem [shape: f32[1,128], index: 12, kind: input, shape index: {}]
  %s13 = inlined_call_operand.vmem [shape: f32[1,128], index: 13, kind: input, shape index: {}]
  %s14 = inlined_call_operand.vmem [shape: f32[1,128], index: 14, kind: input, shape index: {}]
  %s15 = inlined_call_operand.hbm [shape: bf16[8,128], index: 15, kind: output, shape index: {}]
  %s16 = sld [smem:[#allocation0]]
  $region90: #{tpu_custom_call.1} parent=0
    _
  %s18 = ssub.s32 1, %s16
  %s19 = scalar_select 0, %s18, %s16
  $region1: #{tpu_custom_call.1} parent=0
    #allocation2 [shape = 'u8[2048]{0}', space=vmem, size = 0x800, scoped, tag = 'input window, operand 0, single buffered']
    #allocation3 [shape = 's32[1]{0}', space=sflag, size = 0x4, scoped, tag = 'scoped memory for tpu_custom_call.1']
    #allocation4 [shape = 's32[1]{0}', space=sflag, size = 0x4, scoped, tag = 'scoped memory for tpu_custom_call.1']
    #allocation5 [shape = 'u8[32768]{0}', space=vmem, size = 0x8000, scoped, tag = 'input window, operand 1, single buffered']
    #allocation6 [shape = 's32[1]{0}', space=sflag, size = 0x4, scoped, tag = 'scoped memory for tpu_custom_call.1']
    #allocation7 [shape = 'u8[32768]{0}', space=vmem, size = 0x8000, scoped, tag = 'input window, operand 3, single buffered']
    #allocation8 [shape = 'u8[32768]{0}', space=vmem, size = 0x8000, scoped, tag = 'input window, operand 7, single buffered']
    #allocation9 [shape = 's32[1]{0}', space=sflag, size = 0x4, scoped, tag = 'scoped memory for tpu_custom_call.1']
    #allocation10 [shape = 'u8[32768]{0}', space=vmem, size = 0x8000, scoped, tag = 'input window, operand 11, single buffered']
    #allocation11 [shape = 'u8[2048]{0}', space=vmem, size = 0x800, scoped, tag = 'output window, operand 0, single buffered']
    %20 = vsyncpa [#allocation3], 0
    %21 = vsyncpa [#allocation6], 0
    %22 = vsyncpa [#allocation9], 0
    %23 = vsyncpa [#allocation4], 0
    // Predicated region
    $region2: #{tpu_custom_call.1} parent=1 // pred_check
      _
    $region3: #{tpu_custom_call.1} parent=1 // pred_check_branch
      %25 = sbr.rel (0) target = $region5
    $region4: #{tpu_custom_call.1} parent=1 // pred_region
      %s27 = ssub.s32 64, 64
      %28 = vsyncadd [#allocation3], %s27
      %s30 = sshll.u32 [#allocation2], 4
      %s31 = int_to_ptr.vmem [resolvable:$true] %s30
      %33 = dma.hbm_to_vmem [thread:$0]  %s0, 64, %s31, [#allocation3]
    $region5: #{tpu_custom_call.1} parent=1 // pred_fallthru
      _
    // Predicated region
    $region6: #{tpu_custom_call.1} parent=1 // pred_check
      _
    $region7: #{tpu_custom_call.1} parent=1 // pred_check_branch
      %35 = sbr.rel (0) target = $region9
    $region8: #{tpu_custom_call.1} parent=1 // pred_region
      %s37 = ssub.s32 1024, 1024
      %38 = vsyncadd [#allocation6], %s37
      %s39 = sshll.u32 [#allocation5], 4
      %s40 = int_to_ptr.vmem [resolvable:$true] %s39
      %45 = dma.hbm_to_vmem [thread:$0]  %s1, 1024, %s40, [#allocation6], 64, 64, 4
    $region9: #{tpu_custom_call.1} parent=1 // pred_fallthru
      _
    // Predicated region
    $region10: #{tpu_custom_call.1} parent=1 // pred_check
      _
    $region11: #{tpu_custom_call.1} parent=1 // pred_check_branch
      %47 = sbr.rel (0) target = $region13
    $region12: #{tpu_custom_call.1} parent=1 // pred_region
      _
    $region13: #{tpu_custom_call.1} parent=1 // pred_fallthru
      _
    // Predicated region
    $region14: #{tpu_custom_call.1} parent=1 // pred_check
      _
    $region15: #{tpu_custom_call.1} parent=1 // pred_check_branch
      %49 = sbr.rel (0) target = $region17
    $region16: #{tpu_custom_call.1} parent=1 // pred_region
      %s51 = ssub.s32 1024, 1024
      %52 = vsyncadd [#allocation6], %s51
      %s53 = sshll.u32 [#allocation7], 4
      %s54 = int_to_ptr.vmem [resolvable:$true] %s53
      %59 = dma.hbm_to_vmem [thread:$0]  %s3, 1024, %s54, [#allocation6], 64, 64, 4
    $region17: #{tpu_custom_call.1} parent=1 // pred_fallthru
      _
    // Predicated region
    $region18: #{tpu_custom_call.1} parent=1 // pred_check
      _
    $region19: #{tpu_custom_call.1} parent=1 // pred_check_branch
      %61 = sbr.rel (0) target = $region21
    $region20: #{tpu_custom_call.1} parent=1 // pred_region
      _
    $region21: #{tpu_custom_call.1} parent=1 // pred_fallthru
      _
    // Predicated region
    $region22: #{tpu_custom_call.1} parent=1 // pred_check
      _
    $region23: #{tpu_custom_call.1} parent=1 // pred_check_branch
      %63 = sbr.rel (0) target = $region25
    $region24: #{tpu_custom_call.1} parent=1 // pred_region
      _
    $region25: #{tpu_custom_call.1} parent=1 // pred_fallthru
      _
    // Predicated region
    $region26: #{tpu_custom_call.1} parent=1 // pred_check
      _
    $region27: #{tpu_custom_call.1} parent=1 // pred_check_branch
      %65 = sbr.rel (0) target = $region29
    $region28: #{tpu_custom_call.1} parent=1 // pred_region
      _
    $region29: #{tpu_custom_call.1} parent=1 // pred_fallthru
      _
    // Predicated region
    $region30: #{tpu_custom_call.1} parent=1 // pred_check
      _
    $region31: #{tpu_custom_call.1} parent=1 // pred_check_branch
      %67 = sbr.rel (0) target = $region33
    $region32: #{tpu_custom_call.1} parent=1 // pred_region
      %s69 = ssub.s32 1024, 1024
      %70 = vsyncadd [#allocation9], %s69
      %s71 = sshll.u32 [#allocation8], 4
      %s72 = int_to_ptr.vmem [resolvable:$true] %s71
      %77 = dma.hbm_to_vmem [thread:$0]  %s7, 1024, %s72, [#allocation9], 64, 64, 4
    $region33: #{tpu_custom_call.1} parent=1 // pred_fallthru
      _
    // Predicated region
    $region34: #{tpu_custom_call.1} parent=1 // pred_check
      _
    $region35: #{tpu_custom_call.1} parent=1 // pred_check_branch
      %79 = sbr.rel (0) target = $region37
    $region36: #{tpu_custom_call.1} parent=1 // pred_region
      _
    $region37: #{tpu_custom_call.1} parent=1 // pred_fallthru
      _
    // Predicated region
    $region38: #{tpu_custom_call.1} parent=1 // pred_check
      _
    $region39: #{tpu_custom_call.1} parent=1 // pred_check_branch
      %81 = sbr.rel (0) target = $region41
    $region40: #{tpu_custom_call.1} parent=1 // pred_region
      _
    $region41: #{tpu_custom_call.1} parent=1 // pred_fallthru
      _
    // Predicated region
    $region42: #{tpu_custom_call.1} parent=1 // pred_check
      _
    $region43: #{tpu_custom_call.1} parent=1 // pred_check_branch
      %83 = sbr.rel (0) target = $region45
    $region44: #{tpu_custom_call.1} parent=1 // pred_region
      _
    $region45: #{tpu_custom_call.1} parent=1 // pred_fallthru
      _
    // Predicated region
    $region46: #{tpu_custom_call.1} parent=1 // pred_check
      _
    $region47: #{tpu_custom_call.1} parent=1 // pred_check_branch
      %85 = sbr.rel (0) target = $region49
    $region48: #{tpu_custom_call.1} parent=1 // pred_region
      %s87 = ssub.s32 1024, 1024
      %88 = vsyncadd [#allocation9], %s87
      %s89 = sshll.u32 [#allocation10], 4
      %s90 = int_to_ptr.vmem [resolvable:$true] %s89
      %95 = dma.hbm_to_vmem [thread:$0]  %s11, 1024, %s90, [#allocation9], 64, 64, 4
    $region49: #{tpu_custom_call.1} parent=1 // pred_fallthru
      _
    // Predicated region
    $region50: #{tpu_custom_call.1} parent=1 // pred_check
      _
    $region51: #{tpu_custom_call.1} parent=1 // pred_check_branch
      %97 = sbr.rel (0) target = $region53
    $region52: #{tpu_custom_call.1} parent=1 // pred_region
      _
    $region53: #{tpu_custom_call.1} parent=1 // pred_fallthru
      _
    // Predicated region
    $region54: #{tpu_custom_call.1} parent=1 // pred_check
      _
    $region55: #{tpu_custom_call.1} parent=1 // pred_check_branch
      %99 = sbr.rel (0) target = $region57
    $region56: #{tpu_custom_call.1} parent=1 // pred_region
      _
    $region57: #{tpu_custom_call.1} parent=1 // pred_fallthru
      _
    // Predicated region
    $region58: #{tpu_custom_call.1} parent=1 // pred_check
      _
    $region59: #{tpu_custom_call.1} parent=1 // pred_check_branch
      %101 = sbr.rel (0) target = $region61
    $region60: #{tpu_custom_call.1} parent=1 // pred_region
      _
    $region61: #{tpu_custom_call.1} parent=1 // pred_fallthru
      _
    // Predicated region
    $region62: #{tpu_custom_call.1} parent=1 // pred_check
      _
    $region63: #{tpu_custom_call.1} parent=1 // pred_check_branch
      %103 = sbr.rel (0) target = $region65
    $region64: #{tpu_custom_call.1} parent=1 // pred_region
      %104 = dma.done [#allocation3], 64
    $region65: #{tpu_custom_call.1} parent=1 // pred_fallthru
      _
    // Predicated region
    $region66: #{tpu_custom_call.1} parent=1 // pred_check
      _
    $region67: #{tpu_custom_call.1} parent=1 // pred_check_branch
      %106 = sbr.rel (0) target = $region69
    $region68: #{tpu_custom_call.1} parent=1 // pred_region
      %107 = dma.done [#allocation6], 1024
    $region69: #{tpu_custom_call.1} parent=1 // pred_fallthru
      _
    // Predicated region
    $region70: #{tpu_custom_call.1} parent=1 // pred_check
      _
    $region71: #{tpu_custom_call.1} parent=1 // pred_check_branch
      %109 = sbr.rel (0) target = $region73
    $region72: #{tpu_custom_call.1} parent=1 // pred_region
      %110 = dma.done [#allocation6], 1024
    $region73: #{tpu_custom_call.1} parent=1 // pred_fallthru
      _
    // Predicated region
    $region74: #{tpu_custom_call.1} parent=1 // pred_check
      _
    $region75: #{tpu_custom_call.1} parent=1 // pred_check_branch
      %112 = sbr.rel (0) target = $region77
    $region76: #{tpu_custom_call.1} parent=1 // pred_region
      %113 = dma.done [#allocation9], 1024
    $region77: #{tpu_custom_call.1} parent=1 // pred_fallthru
      _
    // Predicated region
    $region78: #{tpu_custom_call.1} parent=1 // pred_check
      _
    $region79: #{tpu_custom_call.1} parent=1 // pred_check_branch
      %115 = sbr.rel (0) target = $region81
    $region80: #{tpu_custom_call.1} parent=1 // pred_region
      %116 = dma.done [#allocation9], 1024
    $region81: #{tpu_custom_call.1} parent=1 // pred_fallthru
      _
    %v118 = vld [vmem:[#allocation2] sm:$0xf]
    %v119 = vld [vmem:[#allocation5] sm:$0xf]
    %v120 = vld [vmem:[#allocation5 + $0x4] sm:$0xf]
    %v121 = vld [vmem:[#allocation5 + $0x8] sm:$0xf]
    %v122 = vld [vmem:[#allocation5 + $0xc] sm:$0xf]
    %v123 = vld [vmem:[#allocation5 + $0x10] sm:$0xf]
    %v124 = vld [vmem:[#allocation5 + $0x14] sm:$0xf]
    %v125 = vld [vmem:[#allocation5 + $0x18] sm:$0xf]
    %v126 = vld [vmem:[#allocation5 + $0x1c] sm:$0xf]
    %v127 = vld [vmem:[#allocation5 + $0x20] sm:$0xf]
    %v128 = vld [vmem:[#allocation5 + $0x24] sm:$0xf]
    %v129 = vld [vmem:[#allocation5 + $0x28] sm:$0xf]
    %v130 = vld [vmem:[#allocation5 + $0x2c] sm:$0xf]
    %v131 = vld [vmem:[#allocation5 + $0x30] sm:$0xf]
    %v132 = vld [vmem:[#allocation5 + $0x34] sm:$0xf]
    %v133 = vld [vmem:[#allocation5 + $0x38] sm:$0xf]
    %v134 = vld [vmem:[#allocation5 + $0x3c] sm:$0xf]
    %v135 = vld [vmem:[%s2] sm:$0x1]
    %v137 = vlaneseq
    %v138 = vshrl.u32 %v137, 7
    %v139 = vsub.s32 0, %v138
    %v140 = vrot.slane %v135, %v139
    %v158 = vunpack.c.l.b16 %v119
    %v159 = vunpack.c.l.b16 %v120
    %v160 = vunpack.c.l.b16 %v121
    %v161 = vunpack.c.l.b16 %v122
    %v162 = vunpack.c.l.b16 %v123
    %v163 = vunpack.c.l.b16 %v124
    %v164 = vunpack.c.l.b16 %v125
    %v165 = vunpack.c.l.b16 %v126
    %v166 = vunpack.c.l.b16 %v127
    %v167 = vunpack.c.l.b16 %v128
    %v168 = vunpack.c.l.b16 %v129
    %v169 = vunpack.c.l.b16 %v130
    %v170 = vunpack.c.l.b16 %v131
    %v171 = vunpack.c.l.b16 %v132
    %v172 = vunpack.c.l.b16 %v133
    %v173 = vunpack.c.l.b16 %v134
    %v174 = vpack.c.b16 %v159, %v158
    %v175 = vpack.c.b16 %v161, %v160
    %v176 = vpack.c.b16 %v163, %v162
    %v177 = vpack.c.b16 %v165, %v164
    %v178 = vpack.c.b16 %v167, %v166
    %v179 = vpack.c.b16 %v169, %v168
    %v180 = vpack.c.b16 %v171, %v170
    %v181 = vpack.c.b16 %v173, %v172
    %190 = vmatprep.subr.bf16.mxu0 0
    %191 = vmatpush1.bf16.msra.mxu0 %v174
    %192 = vmatprep.subr.bf16.mxu0 0
    %193 = vmatpush1.bf16.msra.mxu0 %v175
    %194 = vmatprep.subr.bf16.mxu0 0
    %195 = vmatpush1.bf16.msra.mxu0 %v176
    %196 = vmatprep.subr.bf16.mxu0 0
    %197 = vmatpush1.bf16.msra.mxu0 %v177
    %198 = vmatprep.subr.bf16.mxu0 0
    %199 = vmatpush1.bf16.msra.mxu0 %v178
    %200 = vmatprep.subr.bf16.mxu0 0
    %201 = vmatpush1.bf16.msra.mxu0 %v179
    %202 = vmatprep.subr.bf16.mxu0 0
    %203 = vmatpush1.bf16.msra.mxu0 %v180
    %204 = vmatprep.subr.bf16.mxu0 0
    %205 = vmatpush1.bf16.msra.mxu0 %v181
    %206 = vmatprep.subr.bf16.mxu0 0
    %207 = vmatpush1.bf16.msra.mxu0 0
    %208 = vmatprep.subr.bf16.mxu0 0
    %209 = vmatpush1.bf16.msra.mxu0 0
    %210 = vmatprep.subr.bf16.mxu0 0
    %211 = vmatpush1.bf16.msra.mxu0 0
    %212 = vmatprep.subr.bf16.mxu0 0
    %213 = vmatpush1.bf16.msra.mxu0 0
    %214 = vmatprep.subr.bf16.mxu0 0
    %215 = vmatpush1.bf16.msra.mxu0 0
    %216 = vmatprep.subr.bf16.mxu0 0
    %217 = vmatpush1.bf16.msra.mxu0 0
    %218 = vmatprep.subr.bf16.mxu0 0
    %219 = vmatpush1.bf16.msra.mxu0 0
    %220 = vmatprep.subr.bf16.mxu0 0
    %221 = vmatpush1.bf16.msra.mxu0 0
    %222 = vmatprep.mubr.bf16.mxu0 0
    %223 = vmatmul.mubr.bf16.gmra.mrb[0].mxu0 %v118
    %v224 = vpop.f32.mrb[0].mxu0
    %v225 = vadd.f32 %v140, %v224
    %v226 = vpop.f32.mrb[0].mxu0
    %v227 = vpop.f32.mrb[0].mxu0
    %v228 = vpop.f32.mrb[0].mxu0
    %229 = vdwg.mxu0
    %vm230 = vcmp.gt.f32.partialorder %v225, 0.0
    %v231 = vmul.f32 %v225, 0.2
    %v232 = vsel %vm230, %v225, %v231
    %v233 = vlaneseq
    %v234 = vshrl.u32 %v233, 7
    %vm235 = vcmp.lt.s32.totalorder %v234, 2
    %v236 = vsel %vm235, 1, 0
    %v237 = vcvt.s32.f32 %v236
    %v238 = vpack.c.bf16 %v232, %v232
    %v239 = vld [vmem:[#allocation7] sm:$0xf]
    %v240 = vld [vmem:[#allocation7 + $0x4] sm:$0xf]
    %v241 = vld [vmem:[#allocation7 + $0x8] sm:$0xf]
    %v242 = vld [vmem:[#allocation7 + $0xc] sm:$0xf]
    %v243 = vld [vmem:[#allocation7 + $0x10] sm:$0xf]
    %v244 = vld [vmem:[#allocation7 + $0x14] sm:$0xf]
    %v245 = vld [vmem:[#allocation7 + $0x18] sm:$0xf]
    %v246 = vld [vmem:[#allocation7 + $0x1c] sm:$0xf]
    %v247 = vld [vmem:[#allocation7 + $0x20] sm:$0xf]
    %v248 = vld [vmem:[#allocation7 + $0x24] sm:$0xf]
    %v249 = vld [vmem:[#allocation7 + $0x28] sm:$0xf]
    %v250 = vld [vmem:[#allocation7 + $0x2c] sm:$0xf]
    %v251 = vld [vmem:[#allocation7 + $0x30] sm:$0xf]
    %v252 = vld [vmem:[#allocation7 + $0x34] sm:$0xf]
    %v253 = vld [vmem:[#allocation7 + $0x38] sm:$0xf]
    %v254 = vld [vmem:[#allocation7 + $0x3c] sm:$0xf]
    %v255 = vld [vmem:[%s4] sm:$0x1]
    %v257 = vlaneseq
    %v258 = vshrl.u32 %v257, 7
    %v259 = vsub.s32 0, %v258
    %v260 = vrot.slane %v255, %v259
    %v278 = vunpack.c.l.b16 %v239
    %v279 = vunpack.c.l.b16 %v240
    %v280 = vunpack.c.l.b16 %v241
    %v281 = vunpack.c.l.b16 %v242
    %v282 = vunpack.c.l.b16 %v243
    %v283 = vunpack.c.l.b16 %v244
    %v284 = vunpack.c.l.b16 %v245
    %v285 = vunpack.c.l.b16 %v246
    %v286 = vunpack.c.l.b16 %v247
    %v287 = vunpack.c.l.b16 %v248
    %v288 = vunpack.c.l.b16 %v249
    %v289 = vunpack.c.l.b16 %v250
    %v290 = vunpack.c.l.b16 %v251
    %v291 = vunpack.c.l.b16 %v252
    %v292 = vunpack.c.l.b16 %v253
    %v293 = vunpack.c.l.b16 %v254
    %v294 = vpack.c.b16 %v279, %v278
    %v295 = vpack.c.b16 %v281, %v280
    %v296 = vpack.c.b16 %v283, %v282
    %v297 = vpack.c.b16 %v285, %v284
    %v298 = vpack.c.b16 %v287, %v286
    %v299 = vpack.c.b16 %v289, %v288
    %v300 = vpack.c.b16 %v291, %v290
    %v301 = vpack.c.b16 %v293, %v292
    %310 = vmatprep.subr.bf16.mxu0 0
    %311 = vmatpush1.bf16.msra.mxu0 %v294
    %312 = vmatprep.subr.bf16.mxu0 0
    %313 = vmatpush1.bf16.msra.mxu0 %v295
    %314 = vmatprep.subr.bf16.mxu0 0
    %315 = vmatpush1.bf16.msra.mxu0 %v296
    %316 = vmatprep.subr.bf16.mxu0 0
    %317 = vmatpush1.bf16.msra.mxu0 %v297
    %318 = vmatprep.subr.bf16.mxu0 0
    %319 = vmatpush1.bf16.msra.mxu0 %v298
    %320 = vmatprep.subr.bf16.mxu0 0
    %321 = vmatpush1.bf16.msra.mxu0 %v299
    %322 = vmatprep.subr.bf16.mxu0 0
    %323 = vmatpush1.bf16.msra.mxu0 %v300
    %324 = vmatprep.subr.bf16.mxu0 0
    %325 = vmatpush1.bf16.msra.mxu0 %v301
    %326 = vmatprep.subr.bf16.mxu0 0
    %327 = vmatpush1.bf16.msra.mxu0 0
    %328 = vmatprep.subr.bf16.mxu0 0
    %329 = vmatpush1.bf16.msra.mxu0 0
    %330 = vmatprep.subr.bf16.mxu0 0
    %331 = vmatpush1.bf16.msra.mxu0 0
    %332 = vmatprep.subr.bf16.mxu0 0
    %333 = vmatpush1.bf16.msra.mxu0 0
    %334 = vmatprep.subr.bf16.mxu0 0
    %335 = vmatpush1.bf16.msra.mxu0 0
    %336 = vmatprep.subr.bf16.mxu0 0
    %337 = vmatpush1.bf16.msra.mxu0 0
    %338 = vmatprep.subr.bf16.mxu0 0
    %339 = vmatpush1.bf16.msra.mxu0 0
    %340 = vmatprep.subr.bf16.mxu0 0
    %341 = vmatpush1.bf16.msra.mxu0 0
    %342 = vmatprep.mubr.bf16.mxu0 0
    %343 = vmatmul.mubr.bf16.gmra.mrb[0].mxu0 %v238
    %v344 = vpop.f32.mrb[0].mxu0
    %v345 = vadd.f32 %v260, %v344
    %v346 = vpop.f32.mrb[0].mxu0
    %v347 = vpop.f32.mrb[0].mxu0
    %v348 = vpop.f32.mrb[0].mxu0
    %349 = vdwg.mxu0
    %v350 = vmul.f32 %v345, %v237
    %v351 = vrot.slane %v350, 4
    %v352 = vadd.f32 %v350, %v351
    %v353 = vrot.slane %v352, 2
    %v354 = vadd.f32 %v352, %v353
    %v355 = vrot.slane %v354, 1
    %v356 = vadd.f32 %v354, %v355
    %v357 = vmul.f32 %v356, 0.5
    %v358 = vmul.f32 %v350, %v345
    %v359 = vrot.slane %v358, 4
    %v360 = vadd.f32 %v358, %v359
    %v361 = vrot.slane %v360, 2
    %v362 = vadd.f32 %v360, %v361
    %v363 = vrot.slane %v362, 1
    %v364 = vadd.f32 %v362, %v363
    %v365 = vmul.f32 %v364, 0.5
    %v366 = vmul.f32 %v357, %v357
    %v367 = vsub.f32 %v365, %v366
    %v368 = vadd.f32 %v367, 0.8
    %v369 = vrsqrt.pop %v368
    %v370 = vld [vmem:[%s5] sm:$0x1]
    %v371 = vmul.f32 %v370, %v369
    %v372 = vld [vmem:[%s6] sm:$0x1]
    %v373 = vmul.f32 %v357, %v371
    %v374 = vsub.f32 %v372, %v373
    %v376 = vlaneseq
    %v377 = vshrl.u32 %v376, 7
    %v378 = vsub.s32 0, %v377
    %v379 = vrot.slane %v371, %v378
    %v381 = vmul.f32 %v345, %v379
    %v383 = vlaneseq
    %v384 = vshrl.u32 %v383, 7
    %v385 = vsub.s32 0, %v384
    %v386 = vrot.slane %v374, %v385
    %v388 = vadd.f32 %v381, %v386
    %vm389 = vcmp.gt.f32.partialorder %v388, 0.0
    %v390 = vmul.f32 %v388, 0.2
    %v391 = vsel %vm389, %v388, %v390
    %v392 = vpack.c.bf16 %v391, %v391
    %v393 = vld [vmem:[#allocation8] sm:$0xf]
    %v394 = vld [vmem:[#allocation8 + $0x4] sm:$0xf]
    %v395 = vld [vmem:[#allocation8 + $0x8] sm:$0xf]
    %v396 = vld [vmem:[#allocation8 + $0xc] sm:$0xf]
    %v397 = vld [vmem:[#allocation8 + $0x10] sm:$0xf]
    %v398 = vld [vmem:[#allocation8 + $0x14] sm:$0xf]
    %v399 = vld [vmem:[#allocation8 + $0x18] sm:$0xf]
    %v400 = vld [vmem:[#allocation8 + $0x1c] sm:$0xf]
    %v401 = vld [vmem:[#allocation8 + $0x20] sm:$0xf]
    %v402 = vld [vmem:[#allocation8 + $0x24] sm:$0xf]
    %v403 = vld [vmem:[#allocation8 + $0x28] sm:$0xf]
    %v404 = vld [vmem:[#allocation8 + $0x2c] sm:$0xf]
    %v405 = vld [vmem:[#allocation8 + $0x30] sm:$0xf]
    %v406 = vld [vmem:[#allocation8 + $0x34] sm:$0xf]
    %v407 = vld [vmem:[#allocation8 + $0x38] sm:$0xf]
    %v408 = vld [vmem:[#allocation8 + $0x3c] sm:$0xf]
    %v409 = vld [vmem:[%s8] sm:$0x1]
    %v411 = vlaneseq
    %v412 = vshrl.u32 %v411, 7
    %v413 = vsub.s32 0, %v412
    %v414 = vrot.slane %v409, %v413
    %v432 = vunpack.c.l.b16 %v393
    %v433 = vunpack.c.l.b16 %v394
    %v434 = vunpack.c.l.b16 %v395
    %v435 = vunpack.c.l.b16 %v396
    %v436 = vunpack.c.l.b16 %v397
    %v437 = vunpack.c.l.b16 %v398
    %v438 = vunpack.c.l.b16 %v399
    %v439 = vunpack.c.l.b16 %v400
    %v440 = vunpack.c.l.b16 %v401
    %v441 = vunpack.c.l.b16 %v402
    %v442 = vunpack.c.l.b16 %v403
    %v443 = vunpack.c.l.b16 %v404
    %v444 = vunpack.c.l.b16 %v405
    %v445 = vunpack.c.l.b16 %v406
    %v446 = vunpack.c.l.b16 %v407
    %v447 = vunpack.c.l.b16 %v408
    %v448 = vpack.c.b16 %v433, %v432
    %v449 = vpack.c.b16 %v435, %v434
    %v450 = vpack.c.b16 %v437, %v436
    %v451 = vpack.c.b16 %v439, %v438
    %v452 = vpack.c.b16 %v441, %v440
    %v453 = vpack.c.b16 %v443, %v442
    %v454 = vpack.c.b16 %v445, %v444
    %v455 = vpack.c.b16 %v447, %v446
    %464 = vmatprep.subr.bf16.mxu0 0
    %465 = vmatpush1.bf16.msra.mxu0 %v448
    %466 = vmatprep.subr.bf16.mxu0 0
    %467 = vmatpush1.bf16.msra.mxu0 %v449
    %468 = vmatprep.subr.bf16.mxu0 0
    %469 = vmatpush1.bf16.msra.mxu0 %v450
    %470 = vmatprep.subr.bf16.mxu0 0
    %471 = vmatpush1.bf16.msra.mxu0 %v451
    %472 = vmatprep.subr.bf16.mxu0 0
    %473 = vmatpush1.bf16.msra.mxu0 %v452
    %474 = vmatprep.subr.bf16.mxu0 0
    %475 = vmatpush1.bf16.msra.mxu0 %v453
    %476 = vmatprep.subr.bf16.mxu0 0
    %477 = vmatpush1.bf16.msra.mxu0 %v454
    %478 = vmatprep.subr.bf16.mxu0 0
    %479 = vmatpush1.bf16.msra.mxu0 %v455
    %480 = vmatprep.subr.bf16.mxu0 0
    %481 = vmatpush1.bf16.msra.mxu0 0
    %482 = vmatprep.subr.bf16.mxu0 0
    %483 = vmatpush1.bf16.msra.mxu0 0
    %484 = vmatprep.subr.bf16.mxu0 0
    %485 = vmatpush1.bf16.msra.mxu0 0
    %486 = vmatprep.subr.bf16.mxu0 0
    %487 = vmatpush1.bf16.msra.mxu0 0
    %488 = vmatprep.subr.bf16.mxu0 0
    %489 = vmatpush1.bf16.msra.mxu0 0
    %490 = vmatprep.subr.bf16.mxu0 0
    %491 = vmatpush1.bf16.msra.mxu0 0
    %492 = vmatprep.subr.bf16.mxu0 0
    %493 = vmatpush1.bf16.msra.mxu0 0
    %494 = vmatprep.subr.bf16.mxu0 0
    %495 = vmatpush1.bf16.msra.mxu0 0
    %496 = vmatprep.mubr.bf16.mxu0 0
    %497 = vmatmul.mubr.bf16.gmra.mrb[0].mxu0 %v392
    %v498 = vpop.f32.mrb[0].mxu0
    %v499 = vadd.f32 %v414, %v498
    %v500 = vpop.f32.mrb[0].mxu0
    %v501 = vpop.f32.mrb[0].mxu0
    %v502 = vpop.f32.mrb[0].mxu0
    %503 = vdwg.mxu0
    %v504 = vmul.f32 %v499, %v237
    %v505 = vrot.slane %v504, 4
    %v506 = vadd.f32 %v504, %v505
    %v507 = vrot.slane %v506, 2
    %v508 = vadd.f32 %v506, %v507
    %v509 = vrot.slane %v508, 1
    %v510 = vadd.f32 %v508, %v509
    %v511 = vmul.f32 %v510, 0.5
    %v512 = vmul.f32 %v504, %v499
    %v513 = vrot.slane %v512, 4
    %v514 = vadd.f32 %v512, %v513
    %v515 = vrot.slane %v514, 2
    %v516 = vadd.f32 %v514, %v515
    %v517 = vrot.slane %v516, 1
    %v518 = vadd.f32 %v516, %v517
    %v519 = vmul.f32 %v518, 0.5
    %v520 = vmul.f32 %v511, %v511
    %v521 = vsub.f32 %v519, %v520
    %v522 = vadd.f32 %v521, 0.8
    %v523 = vrsqrt.pop %v522
    %v524 = vld [vmem:[%s9] sm:$0x1]
    %v525 = vmul.f32 %v524, %v523
    %v526 = vld [vmem:[%s10] sm:$0x1]
    %v527 = vmul.f32 %v511, %v525
    %v528 = vsub.f32 %v526, %v527
    %v530 = vlaneseq
    %v531 = vshrl.u32 %v530, 7
    %v532 = vsub.s32 0, %v531
    %v533 = vrot.slane %v525, %v532
    %v535 = vmul.f32 %v499, %v533
    %v537 = vlaneseq
    %v538 = vshrl.u32 %v537, 7
    %v539 = vsub.s32 0, %v538
    %v540 = vrot.slane %v528, %v539
    %v542 = vadd.f32 %v535, %v540
    %vm543 = vcmp.gt.f32.partialorder %v542, 0.0
    %v544 = vmul.f32 %v542, 0.2
    %v545 = vsel %vm543, %v542, %v544
    %v546 = vpack.c.bf16 %v545, %v545
    %v547 = vld [vmem:[#allocation10] sm:$0xf]
    %v548 = vld [vmem:[#allocation10 + $0x4] sm:$0xf]
    %v549 = vld [vmem:[#allocation10 + $0x8] sm:$0xf]
    %v550 = vld [vmem:[#allocation10 + $0xc] sm:$0xf]
    %v551 = vld [vmem:[#allocation10 + $0x10] sm:$0xf]
    %v552 = vld [vmem:[#allocation10 + $0x14] sm:$0xf]
    %v553 = vld [vmem:[#allocation10 + $0x18] sm:$0xf]
    %v554 = vld [vmem:[#allocation10 + $0x1c] sm:$0xf]
    %v555 = vld [vmem:[#allocation10 + $0x20] sm:$0xf]
    %v556 = vld [vmem:[#allocation10 + $0x24] sm:$0xf]
    %v557 = vld [vmem:[#allocation10 + $0x28] sm:$0xf]
    %v558 = vld [vmem:[#allocation10 + $0x2c] sm:$0xf]
    %v559 = vld [vmem:[#allocation10 + $0x30] sm:$0xf]
    %v560 = vld [vmem:[#allocation10 + $0x34] sm:$0xf]
    %v561 = vld [vmem:[#allocation10 + $0x38] sm:$0xf]
    %v562 = vld [vmem:[#allocation10 + $0x3c] sm:$0xf]
    %v563 = vld [vmem:[%s12] sm:$0x1]
    %v565 = vlaneseq
    %v566 = vshrl.u32 %v565, 7
    %v567 = vsub.s32 0, %v566
    %v568 = vrot.slane %v563, %v567
    %v586 = vunpack.c.l.b16 %v547
    %v587 = vunpack.c.l.b16 %v548
    %v588 = vunpack.c.l.b16 %v549
    %v589 = vunpack.c.l.b16 %v550
    %v590 = vunpack.c.l.b16 %v551
    %v591 = vunpack.c.l.b16 %v552
    %v592 = vunpack.c.l.b16 %v553
    %v593 = vunpack.c.l.b16 %v554
    %v594 = vunpack.c.l.b16 %v555
    %v595 = vunpack.c.l.b16 %v556
    %v596 = vunpack.c.l.b16 %v557
    %v597 = vunpack.c.l.b16 %v558
    %v598 = vunpack.c.l.b16 %v559
    %v599 = vunpack.c.l.b16 %v560
    %v600 = vunpack.c.l.b16 %v561
    %v601 = vunpack.c.l.b16 %v562
    %v602 = vpack.c.b16 %v587, %v586
    %v603 = vpack.c.b16 %v589, %v588
    %v604 = vpack.c.b16 %v591, %v590
    %v605 = vpack.c.b16 %v593, %v592
    %v606 = vpack.c.b16 %v595, %v594
    %v607 = vpack.c.b16 %v597, %v596
    %v608 = vpack.c.b16 %v599, %v598
    %v609 = vpack.c.b16 %v601, %v600
    %618 = vmatprep.subr.bf16.mxu0 0
    %619 = vmatpush1.bf16.msra.mxu0 %v602
    %620 = vmatprep.subr.bf16.mxu0 0
    %621 = vmatpush1.bf16.msra.mxu0 %v603
    %622 = vmatprep.subr.bf16.mxu0 0
    %623 = vmatpush1.bf16.msra.mxu0 %v604
    %624 = vmatprep.subr.bf16.mxu0 0
    %625 = vmatpush1.bf16.msra.mxu0 %v605
    %626 = vmatprep.subr.bf16.mxu0 0
    %627 = vmatpush1.bf16.msra.mxu0 %v606
    %628 = vmatprep.subr.bf16.mxu0 0
    %629 = vmatpush1.bf16.msra.mxu0 %v607
    %630 = vmatprep.subr.bf16.mxu0 0
    %631 = vmatpush1.bf16.msra.mxu0 %v608
    %632 = vmatprep.subr.bf16.mxu0 0
    %633 = vmatpush1.bf16.msra.mxu0 %v609
    %634 = vmatprep.subr.bf16.mxu0 0
    %635 = vmatpush1.bf16.msra.mxu0 0
    %636 = vmatprep.subr.bf16.mxu0 0
    %637 = vmatpush1.bf16.msra.mxu0 0
    %638 = vmatprep.subr.bf16.mxu0 0
    %639 = vmatpush1.bf16.msra.mxu0 0
    %640 = vmatprep.subr.bf16.mxu0 0
    %641 = vmatpush1.bf16.msra.mxu0 0
    %642 = vmatprep.subr.bf16.mxu0 0
    %643 = vmatpush1.bf16.msra.mxu0 0
    %644 = vmatprep.subr.bf16.mxu0 0
    %645 = vmatpush1.bf16.msra.mxu0 0
    %646 = vmatprep.subr.bf16.mxu0 0
    %647 = vmatpush1.bf16.msra.mxu0 0
    %648 = vmatprep.subr.bf16.mxu0 0
    %649 = vmatpush1.bf16.msra.mxu0 0
    %650 = vmatprep.mubr.bf16.mxu0 0
    %651 = vmatmul.mubr.bf16.gmra.mrb[0].mxu0 %v546
    %v652 = vpop.f32.mrb[0].mxu0
    %v653 = vadd.f32 %v568, %v652
    %v654 = vpop.f32.mrb[0].mxu0
    %v655 = vpop.f32.mrb[0].mxu0
    %v656 = vpop.f32.mrb[0].mxu0
    %657 = vdwg.mxu0
    %v658 = vmul.f32 %v653, %v237
    %v659 = vrot.slane %v658, 4
    %v660 = vadd.f32 %v658, %v659
    %v661 = vrot.slane %v660, 2
    %v662 = vadd.f32 %v660, %v661
    %v663 = vrot.slane %v662, 1
    %v664 = vadd.f32 %v662, %v663
    %v665 = vmul.f32 %v664, 0.5
    %v666 = vmul.f32 %v658, %v653
    %v667 = vrot.slane %v666, 4
    %v668 = vadd.f32 %v666, %v667
    %v669 = vrot.slane %v668, 2
    %v670 = vadd.f32 %v668, %v669
    %v671 = vrot.slane %v670, 1
    %v672 = vadd.f32 %v670, %v671
    %v673 = vmul.f32 %v672, 0.5
    %v674 = vmul.f32 %v665, %v665
    %v675 = vsub.f32 %v673, %v674
    %v676 = vadd.f32 %v675, 0.8
    %v677 = vrsqrt.pop %v676
    %v678 = vld [vmem:[%s13] sm:$0x1]
    %v679 = vmul.f32 %v678, %v677
    %v680 = vld [vmem:[%s14] sm:$0x1]
    %v681 = vmul.f32 %v665, %v679
    %v682 = vsub.f32 %v680, %v681
    %v684 = vlaneseq
    %v685 = vshrl.u32 %v684, 7
    %v686 = vsub.s32 0, %v685
    %v687 = vrot.slane %v679, %v686
    %v689 = vmul.f32 %v653, %v687
    %v691 = vlaneseq
    %v692 = vshrl.u32 %v691, 7
    %v693 = vsub.s32 0, %v692
    %v694 = vrot.slane %v682, %v693
    %v696 = vadd.f32 %v689, %v694
    %vm697 = vcmp.gt.f32.partialorder %v696, 0.0
    %v698 = vmul.f32 %v696, 0.2
    %v699 = vsel %vm697, %v696, %v698
    %v700 = vpack.c.bf16 %v699, %v699
    %701 = vst [vmem:[#allocation11] sm:$0xf] %v700
    // Predicated region
    $region82: #{tpu_custom_call.1} parent=1 // pred_check
      _
    $region83: #{tpu_custom_call.1} parent=1 // pred_check_branch
      %703 = sbr.rel (0) target = $region85
    $region84: #{tpu_custom_call.1} parent=1 // pred_region
      %s705 = ssub.s32 64, 64
      %706 = vsyncadd [#allocation4], %s705
      %s708 = sshll.u32 [#allocation11], 4
      %s709 = int_to_ptr.vmem [resolvable:$true] %s708
      %711 = dma.vmem_to_hbm [thread:$0]  %s709, 64, %s15, [#allocation4]
    $region85: #{tpu_custom_call.1} parent=1 // pred_fallthru
      _
    // Predicated region
    $region86: #{tpu_custom_call.1} parent=1 // pred_check
      _
    $region87: #{tpu_custom_call.1} parent=1 // pred_check_branch
      %713 = sbr.rel (0) target = $region89
    $region88: #{tpu_custom_call.1} parent=1 // pred_region
      %714 = dma.done [#allocation4], 64
    $region89: #{tpu_custom_call.1} parent=1 // pred_fallthru
      _
    %715 = vsyncpa [#allocation3], 1
    %716 = vsyncpa [#allocation6], 1
    %717 = vsyncpa [#allocation9], 1
    %718 = vsyncpa [#allocation4], 1

</llo_original>
